<compile_context>
chip_gen: v7x
topology: tpu7x:2x2x1
jax: 0.10.0
libtpu: 0.0.40
codegen_flags: <defaults>
</compile_context>

<pallas_src>
import functools

import jax
import jax.numpy as jnp
from jax import lax
from jax.experimental import pallas as pl
from jax.experimental.pallas import tpu as pltpu


_LEVELS = (1, 2, 3)


def _regions(h, w, levels=_LEVELS):
    """Static region boundaries exactly mirroring the PyTorch slicing."""
    regs = []
    for k in levels:
        gap_h = h // k
        gap_w = w // k
        for i in range(k):
            for j in range(k):
                regs.append((gap_h * i, gap_h * (i + 1), gap_w * j, gap_w * (j + 1)))
    return tuple(regs)


def _spp_block_max_kernel(x_ref, out_ref, *, tile_bc, blocks_per_part, bc, mask_tail):
    # x_ref:   (tile_bc, HW) one block of the (B*C, H*W) input
    # out_ref: (8, HW)       per-part running max-map; output doubles as accumulator
    p = pl.program_id(0)   # parallel axis (TensorCore split on v7x)
    i = pl.program_id(1)   # arbitrary (reduction) axis over B*C blocks

    @pl.when(i == 0)
    def _init():
        out_ref[...] = jnp.full(out_ref.shape, -jnp.inf, dtype=out_ref.dtype)

    blk = x_ref[...]

    if mask_tail:
        # Rows past bc in the (partial) last block are undefined -> force to -inf.
        # bc, tile_bc, blocks_per_part are static Python ints at trace time.
        row = (p * blocks_per_part + i) * tile_bc + lax.broadcasted_iota(
            jnp.int32, (tile_bc, 1), 0)
        blk = jnp.where(row < bc, blk, jnp.array(-jnp.inf, dtype=blk.dtype))

    n_groups = tile_bc // 8
    if n_groups > 1:
        # Split on an 8-sublane boundary (layout preserving) and reduce across
        # groups -> (8, HW) partial max.  Pure cross-vreg VPU max, no relayout.
        partial = jnp.max(blk.reshape(n_groups, 8, blk.shape[1]), axis=0)
    else:
        partial = blk

    out_ref[...] = jnp.maximum(out_ref[...], partial)


def spp_net(features, *, target_block_bytes=2 * 1024 * 1024):
    """features: (B, C, H, W) -> (1, 14) float32, matching SPPNet.forward."""
    b, c, h, w = features.shape
    if h < max(_LEVELS) or w < max(_LEVELS):
        # PyTorch would also fail here (empty region -> torch.max on empty tensor).
        raise ValueError(f"SPPNet requires H, W >= {max(_LEVELS)}; got H={h}, W={w}")

    regions = _regions(h, w)
    n_regions = len(regions)
    hw = h * w
    bc = b * c

    # Keep native floating dtype (max is order-preserving; halves HBM traffic for
    # bf16 inputs even on v5e); cast non-float inputs to f32.
    # TODO(synk): int inputs with |v| > 2^24 may round in the f32 cast (matches the
    # original float-based wrapper behaviour).
    compute_dtype = (features.dtype if jnp.issubdtype(features.dtype, jnp.floating)
                     else jnp.float32)
    x = features.astype(compute_dtype).reshape(bc, hw)
    itemsize = jnp.dtype(compute_dtype).itemsize

    # Byte-budget tile on the fully-reduced B*C axis (multiple of 8 sublanes).
    bc_up8 = ((bc + 7) // 8) * 8
    tile_bc = max(8, (target_block_bytes // (hw * itemsize)) // 8 * 8)
    tile_bc = min(tile_bc, bc_up8)
    n_blocks = -(-bc // tile_bc)                      # cdiv
    mask_tail = (bc % tile_bc) != 0                   # partial last block?

    # Two-way TensorCore split (v7x) only when the block count divides cleanly.
    num_parts = 2 if (n_blocks >= 2 and n_blocks % 2 == 0) else 1
    blocks_per_part = n_blocks // num_parts

    kernel = functools.partial(
        _spp_block_max_kernel,
        tile_bc=tile_bc,
        blocks_per_part=blocks_per_part,
        bc=bc,
        mask_tail=mask_tail,
    )

    block_bytes = tile_bc * hw * itemsize
    cost = pl.CostEstimate(
        flops=bc * hw + num_parts * 8 * hw,
        transcendentals=0,
        bytes_accessed=bc * hw * itemsize + num_parts * 8 * hw * itemsize,
    )

    out = pl.pallas_call(
        kernel,
        out_shape=jax.ShapeDtypeStruct((num_parts * 8, hw), compute_dtype),
        grid_spec=pltpu.PrefetchScalarGridSpec(
            num_scalar_prefetch=0,
            grid=(num_parts, blocks_per_part),
            in_specs=[
                pl.BlockSpec((tile_bc, hw),
                             lambda p, i: (p * blocks_per_part + i, 0)),
            ],
            out_specs=pl.BlockSpec((8, hw), lambda p, i: (p, 0)),
        ),
        compiler_params=pltpu.CompilerParams(
            dimension_semantics=("parallel", "arbitrary"),
            # Double-buffered 2 MiB blocks + the tiny output fit with large headroom
            # on every generation (v5e scoped default is only 16 MiB).
            vmem_limit_bytes=32 * 1024 * 1024,
        ),
        cost_estimate=cost,
    )(x)

    # Tiny finalize in plain JAX: collapse the (num_parts*8, HW) max-map and take the
    # 14 static region maxima (exact same slicing as the PyTorch module).
    max_map = jnp.max(out.astype(jnp.float32), axis=0).reshape(h, w)
    vals = [jnp.max(max_map[hs:he, ws:we]) for (hs, he, ws, we) in regions]
    result = jnp.stack(vals)[None, :]
    assert result.shape == (1, n_regions)
    return result


if __name__ == "__main__":
    key = jax.random.PRNGKey(0)
    # Small shapes consistent with the module: batch=2, channels=4, spatial=16x16.
    x = jax.random.normal(key, (2, 4, 16, 16), dtype=jnp.float32)

    spp_fn = jax.jit(spp_net)
    out = spp_fn(x)
    out = jax.block_until_ready(out)

    # Pure-JAX reference (same static region slicing / global max semantics).
    ref_vals = [jnp.max(x[:, :, hs:he, ws:we]) for (hs, he, ws, we) in _regions(16, 16)]
    ref = jnp.stack(ref_vals)[None, :]

    assert out.shape == (1, 14), out.shape
    assert out.dtype == jnp.float32, out.dtype
    assert jnp.allclose(out, ref, rtol=1e-6, atol=1e-6), (out, ref)

    print("KERNEL_OK")
</pallas_src>

<mosaic_0001>
module attributes {stable_mosaic.version = 11 : i64} {
  func.func @_spp_block_max_kernel(%arg0: i32, %arg1: i32, %arg2: memref<8x256xf32, #tpu.memory_space<vmem>>, %arg3: memref<8x256xf32, #tpu.memory_space<vmem>>) attributes {dimension_semantics = [#tpu.dimension_semantics<parallel>, #tpu.dimension_semantics<arbitrary>], iteration_bounds = array<i64: 1, 1>, scalar_prefetch = 0 : i64, scratch_operands = 0 : i64, tpu.core_type = #tpu.core_type<tc>, window_params = [{transform_indices = @transform_0, window_bounds = array<i64: 8, 256>}, {transform_indices = @transform_1, window_bounds = array<i64: 8, 256>}]} {
    %c0_i32 = arith.constant 0 : i32
    %0 = arith.cmpi eq, %arg1, %c0_i32 : i32
    %1 = arith.extui %0 : i1 to i32
    %c0_i32_0 = arith.constant 0 : i32
    %2 = arith.cmpi ne, %1, %c0_i32_0 : i32
    scf.if %2 {
      %cst = arith.constant 0xFF800000 : f32
      %7 = vector.broadcast %cst : f32 to vector<8x256xf32>
      %c0_6 = arith.constant 0 : index
      %c0_7 = arith.constant 0 : index
      %8 = vector.load %arg3[%c0_6, %c0_7] : memref<8x256xf32, #tpu.memory_space<vmem>>, vector<8x256xf32>
      tpu.vector_store %arg3[%c0_6, %c0_7], %7 {strides = array<i32>} : memref<8x256xf32, #tpu.memory_space<vmem>>, vector<8x256xf32>,
    } else {
    }
    %c0 = arith.constant 0 : index
    %c0_1 = arith.constant 0 : index
    %3 = vector.load %arg2[%c0, %c0_1] : memref<8x256xf32, #tpu.memory_space<vmem>>, vector<8x256xf32>
    %c0_2 = arith.constant 0 : index
    %c0_3 = arith.constant 0 : index
    %4 = vector.load %arg3[%c0_2, %c0_3] : memref<8x256xf32, #tpu.memory_space<vmem>>, vector<8x256xf32>
    %5 = arith.maximumf %4, %3 : vector<8x256xf32>
    %c0_4 = arith.constant 0 : index
    %c0_5 = arith.constant 0 : index
    %6 = vector.load %arg3[%c0_4, %c0_5] : memref<8x256xf32, #tpu.memory_space<vmem>>, vector<8x256xf32>
    tpu.vector_store %arg3[%c0_4, %c0_5], %5 {strides = array<i32>} : memref<8x256xf32, #tpu.memory_space<vmem>>, vector<8x256xf32>,
    return
  }
  func.func @transform_0(%arg0: i32, %arg1: i32) -> (i32, i32) {
    %c1_i32 = arith.constant 1 : i32
    %0 = arith.muli %arg0, %c1_i32 : i32
    %1 = arith.addi %0, %arg1 : i32
    %c0_i32 = arith.constant 0 : i32
    %c0_i32_0 = arith.constant 0 : i32
    return %1, %c0_i32 : i32, i32
  }
  func.func @transform_1(%arg0: i32, %arg1: i32) -> (i32, i32) {
    %c0_i32 = arith.constant 0 : i32
    %c0_i32_0 = arith.constant 0 : i32
    return %arg0, %c0_i32 : i32, i32
  }
}

</mosaic_0001>

<llo_original>
// kernel: spp_net.1
$region0: #{spp_net.1}
  #allocation0 [shape = 'u32[]', space=smem, size = 0x4, offset = 0x4, fixed_abs, tag = 'smem constant byte address 0x4 - core index']
  #allocation1 [shape = 'u32[144,128]{1,0:T(1,128)}', space=vmem, size = 0x12000, scoped, tag = 'internal scratch']
  %s0 = inlined_call_operand.vmem [shape: f32[8,256], index: 0, kind: input, shape index: {}]
  %s1 = inlined_call_operand.vmem [shape: f32[8,256], index: 1, kind: output, shape index: {}]
  %s2 = sld [smem:[#allocation0]]
  $region18: #{spp_net.1} parent=0
    _
  %s4 = ssub.s32 1, %s2
  %s5 = scalar_select 0, %s4, %s2
  // Predicated region
  $region2: #{spp_net.1} parent=0 // pred_check
    _
  $region3: #{spp_net.1} parent=0 // pred_check_branch
    %7 = sbr.rel (0) target = $region5
  $region4: #{spp_net.1} parent=0 // pred_region
    %s8 = sadd.s32 0, 0
    %p9 = scmp.lt.s32.totalorder %s8, 0
    %s10 = scalar_select %p9, %s8, 0
    %s11 = smul.addr %s10, 2
    %s12 = smul.addr %s11, 8
    %s13 = scalar_lea.vmem %s0, %s12
    %s14 = sadd.s32 0, 0
  $region5: #{spp_net.1} parent=0 // pred_fallthru
    _
  %s15 = sadd.s32 0, 0
  %p16 = scmp.lt.s32.totalorder %s15, 0
  %s17 = scalar_select %p16, %s15, 0
  %s18 = smul.addr %s17, 2
  %s19 = smul.addr %s18, 8
  %s20 = scalar_lea.vmem %s0, %s19
  %s21 = sadd.s32 0, 0
  %p22 = scmp.lt.s32.totalorder %s21, 0
  %s23 = scalar_select %p22, %s21, 0
  %s24 = smul.addr %s23, 2
  %s25 = smul.addr %s24, 8
  %s26 = scalar_lea.vmem %s0, %s25
  %s27 = sadd.s32 0, 0
  %p28 = scmp.eq.s32.totalorder 0, 0
  // Predicated region
  $region6: #{spp_net.1} parent=0 // pred_check
    %p29 = pneg %p28
  $region7: #{spp_net.1} parent=0 // pred_check_branch
    %31 = sbr.rel (%p29) target = $region9
  $region8: #{spp_net.1} parent=0 // pred_region
    %32 = vst [vmem:[%s1] sm:$0xff] -inf
    %33 = vst [vmem:[%s1 + $0x8] sm:$0xff] -inf
  $region9: #{spp_net.1} parent=0 // pred_fallthru
    _
  %v34 = vld [vmem:[%s26] sm:$0xff]
  %v35 = vld [vmem:[%s26 + $0x8] sm:$0xff]
  %v36 = vld [vmem:[%s1] sm:$0xff]
  %v37 = vld [vmem:[%s1 + $0x8] sm:$0xff]
  %v38 = vmax.f32 %v36, %v34
  %v39 = vmax.f32 %v37, %v35
  %40 = vst [vmem:[%s1] sm:$0xff] %v38
  %41 = vst [vmem:[%s1 + $0x8] sm:$0xff] %v39
  // Predicated region
  $region10: #{spp_net.1} parent=0 // pred_check
    _
  $region11: #{spp_net.1} parent=0 // pred_check_branch
    %43 = sbr.rel (0) target = $region13
  $region12: #{spp_net.1} parent=0 // pred_region
    _
  $region13: #{spp_net.1} parent=0 // pred_fallthru
    _
  // Predicated region
  $region14: #{spp_net.1} parent=0 // pred_check
    _
  $region15: #{spp_net.1} parent=0 // pred_check_branch
    %45 = sbr.rel (0) target = $region17
  $region16: #{spp_net.1} parent=0 // pred_region
    _
  $region17: #{spp_net.1} parent=0 // pred_fallthru
    _

</llo_original>
